<compile_context>
chip_gen: v6e
topology: v6e:2x2x1
jax: 0.10.0
libtpu: 0.0.40
codegen_flags: <defaults>
</compile_context>

<pallas_src>
import jax
import jax.numpy as jnp
from jax.experimental import pallas as pl
from jax.experimental.pallas import tpu as pltpu


def _sca_sum_kernel(x_ref, o_ref):
    """Partial spatial sum for one (batch, split) slice.

    x_ref : (1, C, m, 128)  native dtype — m 128-lane chunks of one image
    o_ref : (1, 1, C, 128)  f32 — lane-dense running sum, resident across the k axis
    """
    k = pl.program_id(2)

    @pl.when(k == 0)
    def _():
        o_ref[...] = jnp.zeros_like(o_ref)

    # Reduce the chunk (sublane) axis: mostly VALU vreg adds + a small intra-vreg fold.
    # The cross-lane (128 -> 1) reduce is deferred to the tiny wrapper epilogue.
    s = jnp.sum(x_ref[0].astype(jnp.float32), axis=1)          # (C, 128)
    o_ref[...] += s[None, None]


def sca(x, w, b, *, target_block_bytes=2 * 1024 * 1024):
    """NAFNet SCA forward.  x: (B, C, H, W); w: (C, C) or (C, C, 1, 1); b: (C,).

    Returns (B, C, 1, 1) in x.dtype.
    """
    B, C, H, W = x.shape
    hw = H * W
    itemsize = jnp.dtype(x.dtype).itemsize

    n_chunks = pl.cdiv(hw, 128)                       # 128-lane chunks per image

    # v7x: a single image can't feed the second TensorCore via the batch axis,
    # so split the spatial blocks across a second parallel axis instead.
    n_split = 2 if (B == 1 and n_chunks >= 16) else 1

    # Sublane tile of the native dtype: 8 (f32), 16 (bf16/f16), 32 (int8).
    sub = 8 * max(1, 4 // itemsize)

    # Chunk-block size m (multiple of `sub`) targeting ~2 MiB per streamed input block.
    m_max = max(sub, (target_block_bytes // (C * 128 * itemsize)) // sub * sub)
    per_split = pl.cdiv(n_chunks, n_split)
    m = min(m_max, pl.cdiv(per_split, sub) * sub)
    n_blk = pl.cdiv(per_split, m)                     # chunk-blocks per split
    n_chunks_pad = n_split * n_blk * m
    hw_pad = n_chunks_pad * 128

    # Native-dtype, lane-dense view of x; zero-pad the spatial axis only if needed
    # (zeros don't affect the sum — we divide by the true H*W below).
    x_flat = x.reshape(B, C, hw)
    if hw_pad != hw:
        x_flat = jnp.pad(x_flat, ((0, 0), (0, 0), (0, hw_pad - hw)))
    x4 = x_flat.reshape(B, C, n_chunks_pad, 128)

    partial = pl.pallas_call(
        _sca_sum_kernel,
        out_shape=jax.ShapeDtypeStruct((B, n_split, C, 128), jnp.float32),
        grid=(B, n_split, n_blk),
        in_specs=[
            # If profiling ever shows exposed DMA at block switches, add
            # pipeline_mode=pl.Buffered(3) here (blocks are only ~2 MiB now).
            pl.BlockSpec((1, C, m, 128),
                         lambda bi, si, ki: (bi, 0, si * n_blk + ki, 0)),
        ],
        out_specs=pl.BlockSpec((1, 1, C, 128),
                               lambda bi, si, ki: (bi, si, 0, 0)),
        compiler_params=pltpu.CompilerParams(
            dimension_semantics=("parallel", "parallel", "arbitrary"),
            vmem_limit_bytes=32 * 1024 * 1024),
    )(x4)

    # Tiny epilogue (hoisted 1x1 conv): combine split/lane partials, average,
    # then one well-shaped (B, C) @ (C, C)^T + b.
    mean = jnp.sum(partial, axis=(1, 3)) * jnp.float32(1.0 / hw)       # (B, C) f32
    w2 = w.reshape(C, C).astype(jnp.float32)
    b2 = b.reshape(C).astype(jnp.float32)
    y = jnp.dot(mean, w2.T, preferred_element_type=jnp.float32) + b2[None, :]
    return y.reshape(B, C, 1, 1).astype(x.dtype)


def sca_reference(x, w, b):
    """Pure-JAX reference matching the PyTorch SCA forward (f32 math)."""
    C = x.shape[1]
    xf = x.astype(jnp.float32)
    m = jnp.mean(xf, axis=(2, 3), keepdims=True)                        # (B, C, 1, 1)
    y = jnp.einsum("oc,bcij->boij", w.reshape(C, C).astype(jnp.float32), m)
    y = y + b.reshape(C).astype(jnp.float32)[None, :, None, None]
    return y.astype(x.dtype)


if __name__ == "__main__":
    key = jax.random.PRNGKey(0)
    kx, kw, kb, kx2 = jax.random.split(key, 4)

    # Main check: small f32 shapes consistent with the module spec.
    B, C, H, W = 2, 4, 16, 16
    x = jax.random.normal(kx, (B, C, H, W), jnp.float32)
    w = jax.random.normal(kw, (C, C, 1, 1), jnp.float32) * 0.2   # Conv2d(C, C, 1).weight
    b = jax.random.normal(kb, (C,), jnp.float32) * 0.1           # Conv2d(C, C, 1).bias

    out = jax.block_until_ready(sca(x, w, b))
    ref = sca_reference(x, w, b)
    assert out.shape == (B, C, 1, 1)
    if not jnp.allclose(out, ref, atol=1e-5, rtol=1e-5):
        raise AssertionError("Pallas SCA output does not match JAX reference (f32)")

    # Secondary check: native bf16 streaming + B=1 two-core split path + padding.
    B2, C2, H2, W2 = 1, 8, 48, 48
    x2 = jax.random.normal(kx2, (B2, C2, H2, W2), jnp.float32).astype(jnp.bfloat16)
    w2 = jax.random.normal(kw, (C2, C2, 1, 1), jnp.float32) * 0.2
    b2 = jax.random.normal(kb, (C2,), jnp.float32) * 0.1

    out2 = jax.block_until_ready(sca(x2, w2, b2))
    ref2 = sca_reference(x2, w2, b2)
    if not jnp.allclose(out2.astype(jnp.float32), ref2.astype(jnp.float32),
                        atol=1e-2, rtol=1e-2):
        raise AssertionError("Pallas SCA output does not match JAX reference (bf16)")

    print("KERNEL_OK")
</pallas_src>

<mosaic_0001>
module attributes {stable_mosaic.version = 11 : i64} {
  func.func @_sca_sum_kernel(%arg0: i32, %arg1: i32, %arg2: i32, %arg3: memref<1x4x8x128xf32, #tpu.memory_space<vmem>>, %arg4: memref<1x1x4x128xf32, #tpu.memory_space<vmem>>) attributes {dimension_semantics = [#tpu.dimension_semantics<parallel>, #tpu.dimension_semantics<parallel>, #tpu.dimension_semantics<arbitrary>], iteration_bounds = array<i64: 2, 1, 1>, scalar_prefetch = 0 : i64, scratch_operands = 0 : i64, tpu.core_type = #tpu.core_type<tc>, window_params = [{transform_indices = @transform_0, window_bounds = array<i64: 1, 4, 8, 128>}, {transform_indices = @transform_1, window_bounds = array<i64: 1, 1, 4, 128>}]} {
    %c0_i32 = arith.constant 0 : i32
    %0 = arith.cmpi eq, %arg2, %c0_i32 : i32
    %1 = arith.extui %0 : i1 to i32
    %c0_i32_0 = arith.constant 0 : i32
    %2 = arith.cmpi ne, %1, %c0_i32_0 : i32
    scf.if %2 {
      %cst_12 = arith.constant 0.000000e+00 : f32
      %10 = vector.broadcast %cst_12 : f32 to vector<1x1x4x128xf32>
      %c0_13 = arith.constant 0 : index
      %c0_14 = arith.constant 0 : index
      %c0_15 = arith.constant 0 : index
      %c0_16 = arith.constant 0 : index
      %11 = vector.load %arg4[%c0_13, %c0_14, %c0_15, %c0_16] : memref<1x1x4x128xf32, #tpu.memory_space<vmem>>, vector<1x1x4x128xf32>
      tpu.vector_store %arg4[%c0_13, %c0_14, %c0_15, %c0_16], %10 {strides = array<i32>} : memref<1x1x4x128xf32, #tpu.memory_space<vmem>>, vector<1x1x4x128xf32>,
    } else {
    }
    %c0 = arith.constant 0 : index
    %c0_1 = arith.constant 0 : index
    %c0_2 = arith.constant 0 : index
    %c0_3 = arith.constant 0 : index
    %3 = vector.load %arg3[%c0, %c0_1, %c0_2, %c0_3] : memref<1x4x8x128xf32, #tpu.memory_space<vmem>>, vector<1x4x8x128xf32>
    %4 = vector.shape_cast %3 : vector<1x4x8x128xf32> to vector<4x8x128xf32>
    %cst = arith.constant dense<0.000000e+00> : vector<4x128xf32>
    %5 = vector.multi_reduction <add>, %4, %cst [1] : vector<4x8x128xf32> to vector<4x128xf32>
    %c0_4 = arith.constant 0 : index
    %c0_5 = arith.constant 0 : index
    %c0_6 = arith.constant 0 : index
    %c0_7 = arith.constant 0 : index
    %6 = vector.load %arg4[%c0_4, %c0_5, %c0_6, %c0_7] : memref<1x1x4x128xf32, #tpu.memory_space<vmem>>, vector<1x1x4x128xf32>
    %7 = vector.shape_cast %5 : vector<4x128xf32> to vector<1x1x4x128xf32>
    %8 = arith.addf %6, %7 : vector<1x1x4x128xf32>
    %c0_8 = arith.constant 0 : index
    %c0_9 = arith.constant 0 : index
    %c0_10 = arith.constant 0 : index
    %c0_11 = arith.constant 0 : index
    %9 = vector.load %arg4[%c0_8, %c0_9, %c0_10, %c0_11] : memref<1x1x4x128xf32, #tpu.memory_space<vmem>>, vector<1x1x4x128xf32>
    tpu.vector_store %arg4[%c0_8, %c0_9, %c0_10, %c0_11], %8 {strides = array<i32>} : memref<1x1x4x128xf32, #tpu.memory_space<vmem>>, vector<1x1x4x128xf32>,
    return
  }
  func.func @transform_0(%arg0: i32, %arg1: i32, %arg2: i32) -> (i32, i32, i32, i32) {
    %c1_i32 = arith.constant 1 : i32
    %0 = arith.muli %arg1, %c1_i32 : i32
    %1 = arith.addi %0, %arg2 : i32
    %c0_i32 = arith.constant 0 : i32
    %c0_i32_0 = arith.constant 0 : i32
    %c0_i32_1 = arith.constant 0 : i32
    return %arg0, %c0_i32, %1, %c0_i32_0 : i32, i32, i32, i32
  }
  func.func @transform_1(%arg0: i32, %arg1: i32, %arg2: i32) -> (i32, i32, i32, i32) {
    %c0_i32 = arith.constant 0 : i32
    %c0_i32_0 = arith.constant 0 : i32
    %c0_i32_1 = arith.constant 0 : i32
    return %arg0, %arg1, %c0_i32, %c0_i32_0 : i32, i32, i32, i32
  }
}

</mosaic_0001>

<llo_original>
// kernel: tpu_custom_call.1
$region0: #{tpu_custom_call.1}
  #allocation0 [shape = 'u32[]', space=smem, size = 0x4, offset = 0x4, fixed_abs, tag = 'smem constant byte address 0x4 - core index']
  #allocation1 [shape = 'u32[144,128]{1,0:T(1,128)}', space=vmem, size = 0x12000, scoped, tag = 'internal scratch']
  %s0 = inlined_call_operand.hbm [shape: f32[2,4,8,128], index: 0, kind: input, shape index: {}]
  %s1 = inlined_call_operand.hbm [shape: f32[2,1,4,128], index: 1, kind: output, shape index: {}]
  %s2 = sld [smem:[#allocation0]]
  $region45: #{tpu_custom_call.1} parent=0
    _
  %s4 = ssub.s32 1, %s2
  %s5 = scalar_select 0, %s4, %s2
  $region1: #{tpu_custom_call.1} parent=0
    #allocation2 [shape = 'u8[32768]{0}', space=vmem, size = 0x8000, scoped, tag = 'input window, operand 0']
    #allocation3 [shape = 's32[2]{0}', space=sflag, size = 0x8, scoped, tag = 'scoped memory for tpu_custom_call.1']
    #allocation4 [shape = 's32[2]{0}', space=sflag, size = 0x8, scoped, tag = 'scoped memory for tpu_custom_call.1']
    #allocation5 [shape = 'u8[4096]{0}', space=vmem, size = 0x1000, scoped, tag = 'output window, operand 0']
    %6 = vsyncpa [#allocation3], 0
    %s7 = scalar_lea.sflag [#allocation3], 1
    %8 = vsyncpa %s7, 0
    %9 = vsyncpa [#allocation4], 0
    %s10 = scalar_lea.sflag [#allocation4], 1
    %11 = vsyncpa %s10, 0
    loop: start=0, step=1, limit=4
    $region2: #{tpu_custom_call.1} parent=1 // loop_pre_header
      _
    $region3: #{tpu_custom_call.1} parent=1 // loop_header
      %s13 = sphi 0, %s17
      %p14 = scmp.ge.s32.totalorder %s13, 4
      %s20 = sphi 0, %s39
      %s21 = sphi 0, %s35
      %s22 = sphi 0, %s31
      %s23 = sphi 0, %s20
      %s24 = sphi 0, %s21
      %s25 = sphi 0, %s22
      %s26 = sphi 0, %s23
      %s27 = sphi 0, %s24
      %s28 = sphi 0, %s25
      %s46 = sphi 0, %s48
      %s49 = sphi 0, %s46
      %s50 = sphi 0, %s49
      %s66 = sphi 0, %s50
      %s74 = sphi 0, %s76
      %s77 = sphi 0, %s74
      %s78 = sphi 0, %s77
      %s94 = sphi 0, %s78
    $region4: #{tpu_custom_call.1} parent=1 // loop_header_branch
      %16 = sbr.rel (%p14) target = $region8
    $region5: #{tpu_custom_call.1} parent=1 // loop_body
      %s18 = ssub.s32 %s13, 1
      %s19 = ssub.s32 %s13, 2
      %s29 = sadd.s32 1, %s22
      %p30 = scmp.ge.s32.totalorder %s29, 1
      %s31 = scalar_select %p30, 0, %s29
      %s32 = sadd.s32 1, %s21
      %s33 = scalar_select %p30, %s32, %s21
      %p34 = scmp.ge.s32.totalorder %s33, 1
      %s35 = scalar_select %p34, 0, %s33
      %s36 = sadd.s32 1, %s20
      %s37 = scalar_select %p34, %s36, %s20
      %p38 = scmp.ge.s32.totalorder %s37, 2
      %s39 = scalar_select %p38, 0, %s37
      %s40 = sadd.s32 %s21, %s22
      %s41 = sadd.s32 %s35, %s31
      %s42 = ssub.s32 %s20, %s39
      %s43 = ssub.s32 %s40, %s41
      %s44 = sor.u32 %s42, %s43
      %p45 = scmp.eq.s32.totalorder %s44, 0
      %s47 = sadd.s32 %s46, 1
      %s48 = scalar_select %p45, %s46, %s47
      %p51 = pneg %p45
      %p52 = scmp.eq.s32.totalorder %s13, 1
      %p53 = por %p51, %p52
      %p54 = scmp.ne.s32.totalorder %s46, %s49
      %p55 = scmp.eq.s32.totalorder %s13, 0
      %p56 = por %p54, %p55
      %p57 = scmp.ne.s32.totalorder %s46, %s49
      %p58 = scmp.eq.s32.totalorder %s18, 1
      %p59 = por %p57, %p58
      %p60 = scmp.ne.s32.totalorder %s49, %s50
      %p61 = scmp.eq.s32.totalorder %s18, 0
      %p62 = por %p60, %p61
      %p63 = scmp.ne.s32.totalorder %s49, %s50
      %p64 = scmp.eq.s32.totalorder %s19, 1
      %p65 = por %p63, %p64
      %p67 = scmp.ne.s32.totalorder %s50, %s66
      %p68 = scmp.eq.s32.totalorder %s19, 0
      %p69 = por %p67, %p68
      %s70 = ssub.s32 %s20, %s39
      %s71 = ssub.s32 %s21, %s35
      %s72 = sor.u32 %s70, %s71
      %p73 = scmp.eq.s32.totalorder %s72, 0
      %s75 = sadd.s32 %s74, 1
      %s76 = scalar_select %p73, %s74, %s75
      %p79 = pneg %p73
      %p80 = scmp.eq.s32.totalorder %s13, 1
      %p81 = por %p79, %p80
      %p82 = scmp.ne.s32.totalorder %s74, %s77
      %p83 = scmp.eq.s32.totalorder %s13, 0
      %p84 = por %p82, %p83
      %p85 = scmp.ne.s32.totalorder %s74, %s77
      %p86 = scmp.eq.s32.totalorder %s18, 1
      %p87 = por %p85, %p86
      %p88 = scmp.ne.s32.totalorder %s77, %s78
      %p89 = scmp.eq.s32.totalorder %s18, 0
      %p90 = por %p88, %p89
      %p91 = scmp.ne.s32.totalorder %s77, %s78
      %p92 = scmp.eq.s32.totalorder %s19, 1
      %p93 = por %p91, %p92
      %p95 = scmp.ne.s32.totalorder %s78, %s94
      %p96 = scmp.eq.s32.totalorder %s19, 0
      %p97 = por %p95, %p96
      %p98 = scmp.le.s32.totalorder 1, %s13
      %p99 = scmp.lt.s32.totalorder %s13, 3
      %p100 = pnand %p98, %p99
      %p101 = pneg %p100
      // Predicated region
      $region9: #{tpu_custom_call.1} parent=5 // pred_check
        _
      $region10: #{tpu_custom_call.1} parent=5 // pred_check_branch
        %103 = sbr.rel (%p100) target = $region12
      $region11: #{tpu_custom_call.1} parent=5 // pred_region
        %s104 = ssub.s32 %s13, 1
      $region12: #{tpu_custom_call.1} parent=5 // pred_fallthru
        _
      %p105 = scmp.lt.s32.totalorder %s13, 2
      // Predicated region
      $region13: #{tpu_custom_call.1} parent=5 // pred_check
        %p106 = pneg %p105
      $region14: #{tpu_custom_call.1} parent=5 // pred_check_branch
        %108 = sbr.rel (%p106) target = $region16
      $region15: #{tpu_custom_call.1} parent=5 // pred_region
        // Predicated region
        $region17: #{tpu_custom_call.1} parent=15 // pred_check
          %p109 = pneg %p56
        $region18: #{tpu_custom_call.1} parent=15 // pred_check_branch
          %111 = sbr.rel (%p109) target = $region20
        $region19: #{tpu_custom_call.1} parent=15 // pred_region
          %s112 = sand.u32 %s46, 1
          %s113 = scalar_lea.sflag [#allocation3], %s112
          %s114 = sand.u32 %s46, 1
          %s115 = smul.addr %s114, 32
          %s116 = scalar_lea.vmem [#allocation2], %s115
          %s117 = sadd.s32 %s21, %s22
          %s119 = ssub.s32 512, 512
          %120 = vsyncadd %s113, %s119
          %s121 = smul.addr %s20, 4
          %s122 = sadd.s32 %s117, %s121
          %s123 = smul.addr %s122, 128
          %s124 = scalar_lea.hbm %s0, %s123
          %s125 = sshll.u32 %s116, 4
          %s126 = int_to_ptr.vmem [resolvable:$true] %s125
          %131 = dma.hbm_to_vmem [thread:$0]  %s124, 512, %s126, %s113, 128, 128, 8
        $region20: #{tpu_custom_call.1} parent=15 // pred_fallthru
          _
      $region16: #{tpu_custom_call.1} parent=5 // pred_fallthru
        _
      %p132 = scmp.le.s32.totalorder 1, %s13
      %p133 = scmp.lt.s32.totalorder %s13, 3
      %p134 = pnand %p132, %p133
      %p135 = pneg %p134
      // Predicated region
      $region21: #{tpu_custom_call.1} parent=5 // pred_check
        _
      $region22: #{tpu_custom_call.1} parent=5 // pred_check_branch
        %137 = sbr.rel (%p134) target = $region24
      $region23: #{tpu_custom_call.1} parent=5 // pred_region
        %s138 = ssub.s32 %s13, 1
        %s139 = sand.u32 %s49, 1
        %s140 = scalar_lea.sflag [#allocation3], %s139
        %s141 = sand.u32 %s49, 1
        %s142 = smul.addr %s141, 32
        %s143 = scalar_lea.vmem [#allocation2], %s142
        // Predicated region
        $region25: #{tpu_custom_call.1} parent=23 // pred_check
          %p144 = pneg %p62
        $region26: #{tpu_custom_call.1} parent=23 // pred_check_branch
          %146 = sbr.rel (%p144) target = $region28
        $region27: #{tpu_custom_call.1} parent=23 // pred_region
          %147 = dma.done %s140, 512
        $region28: #{tpu_custom_call.1} parent=23 // pred_fallthru
          _
        %s148 = sand.u32 %s49, 1
        %s149 = scalar_lea.sflag [#allocation3], %s148
        %s150 = sand.u32 %s49, 1
        %s151 = smul.addr %s150, 32
        %s152 = scalar_lea.vmem [#allocation2], %s151
        %p153 = pneg %p62
        %p154 = pneg %p59
        %p155 = pneg %p90
        %p156 = pneg %p87
        %s157 = sand.u32 %s77, 1
        %s158 = scalar_lea.sflag [#allocation4], %s157
        %s159 = sand.u32 %s77, 1
        %s160 = smul.addr %s159, 4
        %s161 = scalar_lea.vmem [#allocation5], %s160
        %s162 = sadd.s32 %s24, %s25
        %p163 = scmp.eq.s32.totalorder %s25, 0
        // Predicated region
        $region29: #{tpu_custom_call.1} parent=23 // pred_check
          %p164 = pneg %p163
        $region30: #{tpu_custom_call.1} parent=23 // pred_check_branch
          %166 = sbr.rel (%p164) target = $region32
        $region31: #{tpu_custom_call.1} parent=23 // pred_region
          %167 = vst [vmem:[%s161] sm:$0xf] 0.0
        $region32: #{tpu_custom_call.1} parent=23 // pred_fallthru
          _
        %v168 = vld [vmem:[%s143] sm:$0xff]
        %v169 = vld [vmem:[%s143 + $0x8] sm:$0xff]
        %v170 = vld [vmem:[%s143 + $0x10] sm:$0xff]
        %v171 = vld [vmem:[%s143 + $0x18] sm:$0xff]
        %v172 = vrot.slane %v168, 4
        %v173 = vadd.f32 %v168, %v172
        %v174 = vrot.slane %v173, 2
        %v175 = vadd.f32 %v173, %v174
        %v176 = vrot.slane %v175, 1
        %v177 = vadd.f32 %v175, %v176
        %v178 = vrot.slane %v169, 4
        %v179 = vadd.f32 %v169, %v178
        %v180 = vrot.slane %v179, 2
        %v181 = vadd.f32 %v179, %v180
        %v182 = vrot.slane %v181, 1
        %v183 = vadd.f32 %v181, %v182
        %v184 = vrot.slane %v170, 4
        %v185 = vadd.f32 %v170, %v184
        %v186 = vrot.slane %v185, 2
        %v187 = vadd.f32 %v185, %v186
        %v188 = vrot.slane %v187, 1
        %v189 = vadd.f32 %v187, %v188
        %v190 = vrot.slane %v171, 4
        %v191 = vadd.f32 %v171, %v190
        %v192 = vrot.slane %v191, 2
        %v193 = vadd.f32 %v191, %v192
        %v194 = vrot.slane %v193, 1
        %v195 = vadd.f32 %v193, %v194
        %v196 = vld [vmem:[%s161] sm:$0xf]
        %vm201 = vcmask 1041409
        %v202 = vsel %vm201, %v183, %v177
        %vm203 = vcmask 1042434
        %v204 = vsel %vm203, %v189, %v202
        %vm205 = vcmask 1043459
        %v206 = vsel %vm205, %v195, %v204
        %v208 = vadd.f32 %v196, %v206
        %209 = vst [vmem:[%s161] sm:$0xf] %v208
        %s210 = sand.u32 %s77, 1
        %s211 = scalar_lea.sflag [#allocation4], %s210
        %s212 = sand.u32 %s77, 1
        %s213 = smul.addr %s212, 4
        %s214 = scalar_lea.vmem [#allocation5], %s213
        // Predicated region
        $region33: #{tpu_custom_call.1} parent=23 // pred_check
          %p215 = pneg %p87
        $region34: #{tpu_custom_call.1} parent=23 // pred_check_branch
          %217 = sbr.rel (%p215) target = $region36
        $region35: #{tpu_custom_call.1} parent=23 // pred_region
          %s219 = ssub.s32 64, 64
          %220 = vsyncadd %s211, %s219
          %s221 = sadd.s32 %s24, %s23
          %s222 = smul.addr %s221, 64
          %s223 = scalar_lea.hbm %s1, %s222
          %s225 = sshll.u32 %s214, 4
          %s226 = int_to_ptr.vmem [resolvable:$true] %s225
          %228 = dma.vmem_to_hbm [thread:$0]  %s226, 64, %s223, %s211
        $region36: #{tpu_custom_call.1} parent=23 // pred_fallthru
          _
      $region24: #{tpu_custom_call.1} parent=5 // pred_fallthru
        _
      %p229 = scmp.le.s32.totalorder 2, %s13
      // Predicated region
      $region37: #{tpu_custom_call.1} parent=5 // pred_check
        %p230 = pneg %p229
      $region38: #{tpu_custom_call.1} parent=5 // pred_check_branch
        %232 = sbr.rel (%p230) target = $region40
      $region39: #{tpu_custom_call.1} parent=5 // pred_region
        %s233 = ssub.s32 %s13, 2
        // Predicated region
        $region41: #{tpu_custom_call.1} parent=39 // pred_check
          %p234 = pneg %p93
        $region42: #{tpu_custom_call.1} parent=39 // pred_check_branch
          %236 = sbr.rel (%p234) target = $region44
        $region43: #{tpu_custom_call.1} parent=39 // pred_region
          %s237 = sand.u32 %s78, 1
          %s238 = scalar_lea.sflag [#allocation4], %s237
          %s239 = sand.u32 %s78, 1
          %s240 = smul.addr %s239, 4
          %s241 = scalar_lea.vmem [#allocation5], %s240
          %242 = dma.done %s238, 64
        $region44: #{tpu_custom_call.1} parent=39 // pred_fallthru
          _
      $region40: #{tpu_custom_call.1} parent=5 // pred_fallthru
        _
    $region6: #{tpu_custom_call.1} parent=1 // loop_footer
      %s17 = sadd.s32 1, %s13
    $region7: #{tpu_custom_call.1} parent=1 // loop_footer_branch
      %12 = sbr.rel target = $region3
    $region8: #{tpu_custom_call.1} parent=1 // loop_exit
      _
    %243 = vsyncpa [#allocation3], 1
    %s244 = scalar_lea.sflag [#allocation3], 1
    %245 = vsyncpa %s244, 1
    %246 = vsyncpa [#allocation4], 1
    %s247 = scalar_lea.sflag [#allocation4], 1
    %248 = vsyncpa %s247, 1

</llo_original>
